<compile_context>
chip_gen: v5e
topology: v5e:2x2
jax: 0.10.0
libtpu: 0.0.40
codegen_flags: <defaults>
</compile_context>

<pallas_src>
import numpy as np

import jax
import jax.numpy as jnp
from jax.experimental import pallas as pl
from jax.experimental.pallas import tpu as pltpu


# ----------------------------------------------------------------------------
# Parameter init: conv weight (HWIO) + BN folded into per-channel scale/bias
# ----------------------------------------------------------------------------
def init_conv_bn(key, cin, cout, ksz):
    k1, k2, k3, k4, k5 = jax.random.split(key, 5)
    w = jax.random.normal(k1, (ksz, ksz, cin, cout), jnp.float32) * 0.1
    gamma = jax.random.uniform(k2, (cout,), minval=0.5, maxval=1.5)
    beta = jax.random.normal(k3, (cout,), jnp.float32) * 0.1
    mean = jax.random.normal(k4, (cout,), jnp.float32) * 0.1
    var = jax.random.uniform(k5, (cout,), minval=0.5, maxval=1.5)
    eps = 1e-5
    scale = gamma / jnp.sqrt(var + eps)
    bias = beta - mean * scale
    return dict(w=w, scale=scale, bias=bias, ksz=ksz)


# ----------------------------------------------------------------------------
# Host-side constant construction: lane-dense band ("block-tridiagonal") mats
# ----------------------------------------------------------------------------
def _band_matrix_np(wk, width):
    """Band matrix for one conv-kernel row.

    wk: (3, C, C) weights at horizontal taps kx=0,1,2 (BN scale already
    folded into the output-channel axis).  For a pixel row packed as
    (width*C,) lanes, `row @ B` is the SAME-padded 1-D conv over x plus
    channel mixing.
    """
    c = wk.shape[-1]
    l = width * c
    band = np.zeros((l, l), np.float32)
    for xo in range(width):
        for dx in (-1, 0, 1):
            xi = xo + dx
            if 0 <= xi < width:
                band[xi * c:(xi + 1) * c, xo * c:(xo + 1) * c] = wk[dx + 1]
    return band


# ----------------------------------------------------------------------------
# Fused cell kernel (built per-topology at trace time)
# ----------------------------------------------------------------------------
def _make_cell_kernel(plan, collect_inds, ref_layout, H, L):
    """plan: list of (kind, pos, meta); ref_layout: name -> weight-ref slot."""
    has_c3 = any(kind == "conv3x3" for kind, _, _ in plan)

    def kernel(*refs):
        x_ref = refs[0]
        o_ref = refs[-1]
        wrefs = {name: refs[1 + slot] for name, slot in ref_layout.items()}

        if has_c3:
            rows = jax.lax.broadcasted_iota(jnp.int32, (H, L), 0)
            top = rows == 0          # zero the wrapped row of roll(+1)
            bot = rows == (H - 1)    # zero the wrapped row of roll(H-1)

        feats = [x_ref[...]]                      # all feats stay VMEM/vreg resident

        for kind, pos, meta in plan:
            if kind == "skip":
                feats.append(feats[pos])
            elif kind == "none":
                feats.append(None)                # folded zero operand
            elif kind == "agg_sum":
                a, b = feats[pos[0]], feats[pos[1]]
                # TODO(synk): AggregateCell bilinear-upsample branch omitted;
                # every op here is stride-1 so spatial sizes always match.
                if a is None:
                    feats.append(b)
                elif b is None:
                    feats.append(a)
                else:
                    feats.append(a + b)
            else:                                 # conv1x1 / conv3x3 (+BN+ReLU)
                src = feats[pos]
                bias = wrefs["bias"][meta["bias"]]          # (1, L) f32
                if src is None:
                    y = jnp.broadcast_to(bias, (H, L))
                elif kind == "conv1x1":
                    band = wrefs["b1"][meta["band"]]        # (L, L) bf16
                    y = jnp.dot(src.astype(jnp.bfloat16), band,
                                preferred_element_type=jnp.float32) + bias
                else:                                       # conv3x3
                    band = wrefs["b3"][meta["band"]]        # (3L, L) bf16
                    # row_m[i] = src[i-1], row_p[i] = src[i+1] (zero at borders)
                    row_m = jnp.where(top, 0.0,
                                      pltpu.roll(src, shift=1, axis=0))
                    row_p = jnp.where(bot, 0.0,
                                      pltpu.roll(src, shift=H - 1, axis=0))
                    lhs = jnp.concatenate([row_m, src, row_p], axis=-1)
                    y = jnp.dot(lhs.astype(jnp.bfloat16), band,
                                preferred_element_type=jnp.float32) + bias
                feats.append(jnp.maximum(y, 0.0))

        # n-ary collect sum, fused in the same kernel
        acc = None
        for i in collect_inds:
            f = feats[i]
            if f is None:
                continue
            acc = f if acc is None else acc + f
        if acc is None:
            acc = jnp.zeros((H, L), jnp.float32)
        o_ref[...] = acc

    return kernel


# ----------------------------------------------------------------------------
# Pure-JAX reference (correctness check of the fused Pallas path)
# ----------------------------------------------------------------------------
def _ref_conv_bn_relu(x, p):
    y = jax.lax.conv_general_dilated(
        x, p["w"], (1, 1), "SAME",
        dimension_numbers=("NHWC", "HWIO", "NHWC"))
    y = y * p["scale"].reshape(1, 1, 1, -1) + p["bias"].reshape(1, 1, 1, -1)
    return jnp.maximum(y, 0.0)


# ----------------------------------------------------------------------------
# ContextualCell_v1
# ----------------------------------------------------------------------------
class ContextualCellV1:
    """Mirror of the PyTorch ContextualCell_v1 __init__/forward logic."""

    def __init__(self, op_names, config, inp, key, repeats=1, concat=False):
        assert repeats == 1 and not concat
        self._ops = []           # list of (kind, params)
        self._pos = []
        self._collect_inds = [0]
        self._packed = {}        # repacked constants, keyed by (h, w, c)
        keys = list(jax.random.split(key, 64))
        self._kidx = 0

        def make_op(name):
            if name == "skip_connect":
                return ("skip", None)
            if name == "none":
                return ("none", None)
            k = keys[self._kidx]
            self._kidx += 1
            if name == "conv1x1":
                return ("conv", init_conv_bn(k, inp, inp, 1))
            if name == "conv3x3":
                return ("conv", init_conv_bn(k, inp, inp, 3))
            raise ValueError(name)

        for ind, op in enumerate(config):
            if ind == 0:
                pos = 0
                op_id = op
                self._collect_inds.remove(pos)
                self._ops.append(make_op(op_names[op_id]))
                self._pos.append(pos)
                self._collect_inds.append(ind + 1)
            else:
                pos1, pos2, op_id1, op_id2 = op
                for pos, op_id in zip([pos1, pos2], [op_id1, op_id2]):
                    if pos in self._collect_inds:
                        self._collect_inds.remove(pos)
                    self._ops.append(make_op(op_names[op_id]))
                    self._pos.append(pos)
                # AggregateCell(pre_transform=False, concat=False) == sum
                self._ops.append(("agg_sum", None))
                self._pos.append([ind * 3 - 1, ind * 3])
                self._collect_inds.append(ind * 3 + 1)

    # -- build packed lane-dense constants for a given image shape ------------
    def _build_packed(self, h, w, c):
        l = w * c
        bands3, bands1, biases = [], [], []
        plan = []
        for pos, (kind, p) in zip(self._pos, self._ops):
            if kind in ("skip", "none", "agg_sum"):
                plan.append((kind, pos, None))
                continue
            wnp = np.asarray(p["w"], np.float32)          # (k, k, cin, cout)
            scale = np.asarray(p["scale"], np.float32)
            bias = np.asarray(p["bias"], np.float32)
            # Fold BN scale into the conv output channels (exact).
            wnp = wnp * scale.reshape(1, 1, 1, -1)
            bidx = len(biases)
            biases.append(np.tile(bias, w).reshape(1, l))
            if p["ksz"] == 1:
                wk3 = np.zeros((3, c, c), np.float32)
                wk3[1] = wnp[0, 0]
                j = len(bands1)
                bands1.append(_band_matrix_np(wk3, w))     # block-diagonal
                plan.append(("conv1x1", pos, {"band": j, "bias": bidx}))
            else:
                # Stack the 3 per-kernel-row bands along K: (3*l, l).
                stack = np.concatenate(
                    [_band_matrix_np(wnp[ky], w) for ky in range(3)], axis=0)
                j = len(bands3)
                bands3.append(stack)
                plan.append(("conv3x3", pos, {"band": j, "bias": bidx}))

        w_inputs = []
        ref_layout = {}
        if bands3:
            ref_layout["b3"] = len(w_inputs)
            w_inputs.append(jnp.asarray(np.stack(bands3), jnp.bfloat16))
        if bands1:
            ref_layout["b1"] = len(w_inputs)
            w_inputs.append(jnp.asarray(np.stack(bands1), jnp.bfloat16))
        if biases:
            ref_layout["bias"] = len(w_inputs)
            w_inputs.append(jnp.asarray(np.stack(biases), jnp.float32))
        return w_inputs, ref_layout, plan, l

    # -- fused Pallas forward --------------------------------------------------
    def forward_pallas(self, x):
        n, h, w, c = x.shape
        ck = (h, w, c)
        if ck not in self._packed:
            self._packed[ck] = self._build_packed(h, w, c)
        w_inputs, ref_layout, plan, l = self._packed[ck]

        x2 = x.reshape(n, h, l)                # (N, H, W*C) lane-dense packing
        kernel = _make_cell_kernel(plan, tuple(self._collect_inds),
                                   ref_layout, h, l)

        in_specs = [pl.BlockSpec((None, h, l), lambda b: (b, 0, 0))]
        for arr in w_inputs:
            # Constant block index: weights DMA'd once, resident across grid.
            in_specs.append(pl.BlockSpec(arr.shape, lambda b: (0, 0, 0)))

        out = pl.pallas_call(
            kernel,
            out_shape=jax.ShapeDtypeStruct((n, h, l), jnp.float32),
            grid=(n,),
            in_specs=in_specs,
            out_specs=pl.BlockSpec((None, h, l), lambda b: (b, 0, 0)),
            compiler_params=pltpu.CompilerParams(
                dimension_semantics=("parallel",)),
        )(x2, *w_inputs)
        return out.reshape(n, h, w, c)

    # -- pure-JAX reference ----------------------------------------------------
    def forward_ref(self, x):
        feats = [x]
        for pos, (kind, p) in zip(self._pos, self._ops):
            if kind == "agg_sum":
                feats.append(feats[pos[0]] + feats[pos[1]])
            elif kind == "skip":
                feats.append(feats[pos])
            elif kind == "none":
                feats.append(jnp.zeros_like(feats[pos]))
            else:
                feats.append(_ref_conv_bn_relu(feats[pos], p))
        out = feats[self._collect_inds[0]]
        for i in self._collect_inds[1:]:
            out = out + feats[i]
        return out

    def forward(self, x, backend="pallas"):
        """x: NHWC tensor."""
        if backend == "pallas":
            return self.forward_pallas(x)
        return self.forward_ref(x)


# ----------------------------------------------------------------------------
if __name__ == "__main__":
    key = jax.random.PRNGKey(0)
    kx, kp1, kp2 = jax.random.split(key, 3)

    N, C, H, W = 2, 8, 16, 16
    # PyTorch-style NCHW input, converted to NHWC for the kernels.
    x_nchw = jax.random.normal(kx, (N, C, H, W), jnp.float32)
    x_nhwc = jnp.transpose(x_nchw, (0, 2, 3, 1))

    def rel_err(a, b):
        return float(jnp.max(jnp.abs(a - b))) / max(1.0, float(jnp.max(jnp.abs(b))))

    # --- test 1: conv1x1 / conv3x3 / skip_connect DAG -------------------------
    op_names = ["conv1x1", "conv3x3", "skip_connect"]
    # config[0]=op id on x; config[i>0]=(pos1, pos2, op_id1, op_id2)
    config = [1, [0, 1, 2, 0], [2, 3, 1, 2]]
    cell = ContextualCellV1(op_names, config, inp=C, key=kp1,
                            repeats=1, concat=False)

    fwd = jax.jit(cell.forward_pallas)          # one cached executable
    out = jax.block_until_ready(fwd(x_nhwc))
    ref = jax.block_until_ready(cell.forward_ref(x_nhwc))
    assert out.shape == (N, H, W, C)
    e1 = rel_err(out, ref)
    assert e1 < 3e-2, f"test1 mismatch vs reference: rel_err={e1}"

    # --- test 2: includes the 'none' op (zero-operand folding path) -----------
    op_names2 = ["conv1x1", "conv3x3", "skip_connect", "none"]
    config2 = [2, [0, 1, 3, 0]]
    cell2 = ContextualCellV1(op_names2, config2, inp=C, key=kp2,
                             repeats=1, concat=False)
    fwd2 = jax.jit(cell2.forward_pallas)
    out2 = jax.block_until_ready(fwd2(x_nhwc))
    ref2 = jax.block_until_ready(cell2.forward_ref(x_nhwc))
    e2 = rel_err(out2, ref2)
    assert e2 < 3e-2, f"test2 mismatch vs reference: rel_err={e2}"

    print("KERNEL_OK")
</pallas_src>

<mosaic_0001>
module attributes {stable_mosaic.version = 11 : i64} {
  func.func @kernel(%arg0: i32, %arg1: memref<1x16x128xf32, #tpu.memory_space<vmem>>, %arg2: memref<2x384x128xbf16, #tpu.memory_space<vmem>>, %arg3: memref<1x128x128xbf16, #tpu.memory_space<vmem>>, %arg4: memref<3x1x128xf32, #tpu.memory_space<vmem>>, %arg5: memref<1x16x128xf32, #tpu.memory_space<vmem>>) attributes {dimension_semantics = [#tpu.dimension_semantics<parallel>], iteration_bounds = array<i64: 2>, scalar_prefetch = 0 : i64, scratch_operands = 0 : i64, tpu.core_type = #tpu.core_type<tc>, window_params = [{transform_indices = @transform_0, window_bounds = array<i64: 1, 16, 128>}, {pipeline_mode = #tpu.pipeline_mode<synchronous>, transform_indices = @transform_1, window_bounds = array<i64: 2, 384, 128>}, {pipeline_mode = #tpu.pipeline_mode<synchronous>, transform_indices = @transform_2, window_bounds = array<i64: 1, 128, 128>}, {pipeline_mode = #tpu.pipeline_mode<synchronous>, transform_indices = @transform_3, window_bounds = array<i64: 3, 1, 128>}, {transform_indices = @transform_4, window_bounds = array<i64: 1, 16, 128>}]} {
    %0 = tpu.iota {dimensions = array<i32: 0>} : vector<16x128xi32>
    %c0_i32 = arith.constant 0 : i32
    %1 = vector.broadcast %c0_i32 : i32 to vector<16x128xi32>
    %2 = arith.cmpi eq, %0, %1 : vector<16x128xi32>
    %c15_i32 = arith.constant 15 : i32
    %3 = vector.broadcast %c15_i32 : i32 to vector<16x128xi32>
    %4 = arith.cmpi eq, %0, %3 : vector<16x128xi32>
    %c0 = arith.constant 0 : index
    %c0_0 = arith.constant 0 : index
    %c0_1 = arith.constant 0 : index
    %5 = vector.load %arg1[%c0, %c0_0, %c0_1] : memref<1x16x128xf32, #tpu.memory_space<vmem>>, vector<1x16x128xf32>
    %6 = vector.shape_cast %5 : vector<1x16x128xf32> to vector<16x128xf32>
    %c0_2 = arith.constant 0 : index
    %c0_3 = arith.constant 0 : index
    %c0_4 = arith.constant 0 : index
    %7 = vector.load %arg4[%c0_2, %c0_3, %c0_4] : memref<3x1x128xf32, #tpu.memory_space<vmem>>, vector<1x1x128xf32>
    %8 = vector.shape_cast %7 : vector<1x1x128xf32> to vector<1x128xf32>
    %c0_5 = arith.constant 0 : index
    %c0_6 = arith.constant 0 : index
    %c0_7 = arith.constant 0 : index
    %9 = vector.load %arg2[%c0_5, %c0_6, %c0_7] : memref<2x384x128xbf16, #tpu.memory_space<vmem>>, vector<1x384x128xbf16>
    %10 = vector.shape_cast %9 : vector<1x384x128xbf16> to vector<384x128xbf16>
    %c1_i32 = arith.constant 1 : i32
    %11 = tpu.dynamic_rotate %6 by %c1_i32 dim 0 : vector<16x128xf32>, i32 -> vector<16x128xf32>
    %cst = arith.constant 0.000000e+00 : f32
    %12 = vector.broadcast %cst : f32 to vector<16x128xf32>
    %13 = arith.select %2, %12, %11 : vector<16x128xi1>, vector<16x128xf32>
    %c15_i32_8 = arith.constant 15 : i32
    %14 = tpu.dynamic_rotate %6 by %c15_i32_8 dim 0 : vector<16x128xf32>, i32 -> vector<16x128xf32>
    %cst_9 = arith.constant 0.000000e+00 : f32
    %15 = vector.broadcast %cst_9 : f32 to vector<16x128xf32>
    %16 = arith.select %4, %15, %14 : vector<16x128xi1>, vector<16x128xf32>
    %17 = tpu.concatenate %13, %6, %16 in 1 : vector<16x128xf32>, vector<16x128xf32>, vector<16x128xf32> -> vector<16x384xf32>
    %18 = arith.truncf %17 : vector<16x384xf32> to vector<16x384xbf16>
    %cst_10 = arith.constant dense<0.000000e+00> : vector<16x128xf32>
    %19 = tpu.matmul %18, %10, %cst_10 {dimension_numbers = #tpu.dot_dimension_numbers<[1], [0], [0], [1], [0, 0, 1, 1], [], []>} : vector<16x384xbf16>, vector<384x128xbf16>, vector<16x128xf32> -> vector<16x128xf32>
    %20 = vector.broadcast %8 : vector<1x128xf32> to vector<16x128xf32>
    %21 = arith.addf %19, %20 : vector<16x128xf32>
    %cst_11 = arith.constant 0.000000e+00 : f32
    %22 = vector.broadcast %cst_11 : f32 to vector<16x128xf32>
    %23 = arith.maximumf %21, %22 : vector<16x128xf32>
    %c1 = arith.constant 1 : index
    %c0_12 = arith.constant 0 : index
    %c0_13 = arith.constant 0 : index
    %24 = vector.load %arg4[%c1, %c0_12, %c0_13] : memref<3x1x128xf32, #tpu.memory_space<vmem>>, vector<1x1x128xf32>
    %25 = vector.shape_cast %24 : vector<1x1x128xf32> to vector<1x128xf32>
    %c0_14 = arith.constant 0 : index
    %c0_15 = arith.constant 0 : index
    %c0_16 = arith.constant 0 : index
    %26 = vector.load %arg3[%c0_14, %c0_15, %c0_16] : memref<1x128x128xbf16, #tpu.memory_space<vmem>>, vector<1x128x128xbf16>
    %27 = vector.shape_cast %26 : vector<1x128x128xbf16> to vector<128x128xbf16>
    %28 = arith.truncf %23 : vector<16x128xf32> to vector<16x128xbf16>
    %cst_17 = arith.constant dense<0.000000e+00> : vector<16x128xf32>
    %29 = tpu.matmul %28, %27, %cst_17 {dimension_numbers = #tpu.dot_dimension_numbers<[1], [0], [0], [1], [0, 0, 1, 1], [], []>} : vector<16x128xbf16>, vector<128x128xbf16>, vector<16x128xf32> -> vector<16x128xf32>
    %30 = vector.broadcast %25 : vector<1x128xf32> to vector<16x128xf32>
    %31 = arith.addf %29, %30 : vector<16x128xf32>
    %cst_18 = arith.constant 0.000000e+00 : f32
    %32 = vector.broadcast %cst_18 : f32 to vector<16x128xf32>
    %33 = arith.maximumf %31, %32 : vector<16x128xf32>
    %34 = arith.addf %6, %33 : vector<16x128xf32>
    %c2 = arith.constant 2 : index
    %c0_19 = arith.constant 0 : index
    %c0_20 = arith.constant 0 : index
    %35 = vector.load %arg4[%c2, %c0_19, %c0_20] : memref<3x1x128xf32, #tpu.memory_space<vmem>>, vector<1x1x128xf32>
    %36 = vector.shape_cast %35 : vector<1x1x128xf32> to vector<1x128xf32>
    %c1_21 = arith.constant 1 : index
    %c0_22 = arith.constant 0 : index
    %c0_23 = arith.constant 0 : index
    %37 = vector.load %arg2[%c1_21, %c0_22, %c0_23] : memref<2x384x128xbf16, #tpu.memory_space<vmem>>, vector<1x384x128xbf16>
    %38 = vector.shape_cast %37 : vector<1x384x128xbf16> to vector<384x128xbf16>
    %c1_i32_24 = arith.constant 1 : i32
    %39 = tpu.dynamic_rotate %6 by %c1_i32_24 dim 0 : vector<16x128xf32>, i32 -> vector<16x128xf32>
    %cst_25 = arith.constant 0.000000e+00 : f32
    %40 = vector.broadcast %cst_25 : f32 to vector<16x128xf32>
    %41 = arith.select %2, %40, %39 : vector<16x128xi1>, vector<16x128xf32>
    %c15_i32_26 = arith.constant 15 : i32
    %42 = tpu.dynamic_rotate %6 by %c15_i32_26 dim 0 : vector<16x128xf32>, i32 -> vector<16x128xf32>
    %cst_27 = arith.constant 0.000000e+00 : f32
    %43 = vector.broadcast %cst_27 : f32 to vector<16x128xf32>
    %44 = arith.select %4, %43, %42 : vector<16x128xi1>, vector<16x128xf32>
    %45 = tpu.concatenate %41, %6, %44 in 1 : vector<16x128xf32>, vector<16x128xf32>, vector<16x128xf32> -> vector<16x384xf32>
    %46 = arith.truncf %45 : vector<16x384xf32> to vector<16x384xbf16>
    %cst_28 = arith.constant dense<0.000000e+00> : vector<16x128xf32>
    %47 = tpu.matmul %46, %38, %cst_28 {dimension_numbers = #tpu.dot_dimension_numbers<[1], [0], [0], [1], [0, 0, 1, 1], [], []>} : vector<16x384xbf16>, vector<384x128xbf16>, vector<16x128xf32> -> vector<16x128xf32>
    %48 = vector.broadcast %36 : vector<1x128xf32> to vector<16x128xf32>
    %49 = arith.addf %47, %48 : vector<16x128xf32>
    %cst_29 = arith.constant 0.000000e+00 : f32
    %50 = vector.broadcast %cst_29 : f32 to vector<16x128xf32>
    %51 = arith.maximumf %49, %50 : vector<16x128xf32>
    %52 = arith.addf %51, %33 : vector<16x128xf32>
    %53 = arith.addf %34, %52 : vector<16x128xf32>
    %c0_30 = arith.constant 0 : index
    %c0_31 = arith.constant 0 : index
    %c0_32 = arith.constant 0 : index
    %54 = vector.load %arg5[%c0_30, %c0_31, %c0_32] : memref<1x16x128xf32, #tpu.memory_space<vmem>>, vector<1x16x128xf32>
    %55 = vector.shape_cast %54 : vector<1x16x128xf32> to vector<16x128xf32>
    %56 = vector.shape_cast %53 : vector<16x128xf32> to vector<1x16x128xf32>
    tpu.vector_store %arg5[%c0_30, %c0_31, %c0_32], %56 {strides = array<i32>} : memref<1x16x128xf32, #tpu.memory_space<vmem>>, vector<1x16x128xf32>,
    return
  }
  func.func @transform_0(%arg0: i32) -> (i32, i32, i32) {
    %c0_i32 = arith.constant 0 : i32
    %c0_i32_0 = arith.constant 0 : i32
    %c0_i32_1 = arith.constant 0 : i32
    return %arg0, %c0_i32, %c0_i32_0 : i32, i32, i32
  }
  func.func @transform_1(%arg0: i32) -> (i32, i32, i32) {
    %c0_i32 = arith.constant 0 : i32
    %c0_i32_0 = arith.constant 0 : i32
    %c0_i32_1 = arith.constant 0 : i32
    %c0_i32_2 = arith.constant 0 : i32
    return %c0_i32, %c0_i32_0, %c0_i32_1 : i32, i32, i32
  }
  func.func @transform_2(%arg0: i32) -> (i32, i32, i32) {
    %c0_i32 = arith.constant 0 : i32
    %c0_i32_0 = arith.constant 0 : i32
    %c0_i32_1 = arith.constant 0 : i32
    %c0_i32_2 = arith.constant 0 : i32
    return %c0_i32, %c0_i32_0, %c0_i32_1 : i32, i32, i32
  }
  func.func @transform_3(%arg0: i32) -> (i32, i32, i32) {
    %c0_i32 = arith.constant 0 : i32
    %c0_i32_0 = arith.constant 0 : i32
    %c0_i32_1 = arith.constant 0 : i32
    %c0_i32_2 = arith.constant 0 : i32
    return %c0_i32, %c0_i32_0, %c0_i32_1 : i32, i32, i32
  }
  func.func @transform_4(%arg0: i32) -> (i32, i32, i32) {
    %c0_i32 = arith.constant 0 : i32
    %c0_i32_0 = arith.constant 0 : i32
    %c0_i32_1 = arith.constant 0 : i32
    return %arg0, %c0_i32, %c0_i32_0 : i32, i32, i32
  }
}

</mosaic_0001>

<llo_original>
// kernel: forward_pallas.1
$region0: #{forward_pallas.1}
  #allocation0 [shape = 'u32[]', space=smem, size = 0x4, offset = 0x4, fixed_abs, tag = 'smem constant byte address 0x4 - core index']
  #allocation1 [shape = 'u32[72,128]{1,0:T(1,128)}', space=vmem, size = 0x9000, scoped, tag = 'internal scratch']
  %s0 = inlined_call_operand.vmem [shape: f32[2,16,128], index: 0, kind: input, shape index: {}]
  %s1 = inlined_call_operand.vmem [shape: bf16[2,384,128], index: 1, kind: input, shape index: {}]
  %s2 = inlined_call_operand.vmem [shape: bf16[1,128,128], index: 2, kind: input, shape index: {}]
  %s3 = inlined_call_operand.vmem [shape: f32[3,1,128], index: 3, kind: input, shape index: {}]
  %s4 = inlined_call_operand.vmem [shape: f32[2,16,128], index: 4, kind: output, shape index: {}]
  %s5 = sld [smem:[#allocation0]]
  $region49: #{forward_pallas.1} parent=0
    _
  %s7 = ssub.s32 1, %s5
  %s8 = scalar_select 0, %s7, %s5
  loop: start=0, step=1, limit=4
  $region2: #{forward_pallas.1} parent=0 // loop_pre_header
    _
  $region3: #{forward_pallas.1} parent=0 // loop_header
    %s10 = sphi 0, %s14
    %p11 = scmp.ge.s32.totalorder %s10, 4
    %s20 = sphi 0, %s22
    %s23 = sphi 0, %s20
    %s24 = sphi 0, %s23
    %s40 = sphi 0, %s24
    %s44 = sphi 0, %s44
    %s46 = sphi 0, %s44
    %s47 = sphi 0, %s46
    %s61 = sphi 0, %s47
    %s65 = sphi 0, %s65
    %s67 = sphi 0, %s65
    %s68 = sphi 0, %s67
    %s82 = sphi 0, %s68
    %s86 = sphi 0, %s86
    %s88 = sphi 0, %s86
    %s89 = sphi 0, %s88
    %s103 = sphi 0, %s89
    %s109 = sphi 0, %s111
    %s112 = sphi 0, %s109
    %s113 = sphi 0, %s112
    %s129 = sphi 0, %s113
  $region4: #{forward_pallas.1} parent=0 // loop_header_branch
    %13 = sbr.rel (%p11) target = $region8
  $region5: #{forward_pallas.1} parent=0 // loop_body
    %s15 = ssub.s32 %s10, 1
    %s16 = ssub.s32 %s10, 2
    %s17 = sadd.s32 %s10, 1
    %s18 = ssub.s32 %s10, %s17
    %p19 = scmp.eq.s32.totalorder %s18, 0
    %s21 = sadd.s32 %s20, 1
    %s22 = scalar_select %p19, %s20, %s21
    %p25 = pneg %p19
    %p26 = scmp.eq.s32.totalorder %s10, 1
    %p27 = por %p25, %p26
    %p28 = scmp.ne.s32.totalorder %s20, %s23
    %p29 = scmp.eq.s32.totalorder %s10, 0
    %p30 = por %p28, %p29
    %p31 = scmp.ne.s32.totalorder %s20, %s23
    %p32 = scmp.eq.s32.totalorder %s15, 1
    %p33 = por %p31, %p32
    %p34 = scmp.ne.s32.totalorder %s23, %s24
    %p35 = scmp.eq.s32.totalorder %s15, 0
    %p36 = por %p34, %p35
    %p37 = scmp.ne.s32.totalorder %s23, %s24
    %p38 = scmp.eq.s32.totalorder %s16, 1
    %p39 = por %p37, %p38
    %p41 = scmp.ne.s32.totalorder %s24, %s40
    %p42 = scmp.eq.s32.totalorder %s16, 0
    %p43 = por %p41, %p42
    %s45 = sadd.s32 %s44, 1
    %p48 = scmp.eq.s32.totalorder %s10, 1
    %p49 = scmp.ne.s32.totalorder %s44, %s46
    %p50 = scmp.eq.s32.totalorder %s10, 0
    %p51 = por %p49, %p50
    %p52 = scmp.ne.s32.totalorder %s44, %s46
    %p53 = scmp.eq.s32.totalorder %s15, 1
    %p54 = por %p52, %p53
    %p55 = scmp.ne.s32.totalorder %s46, %s47
    %p56 = scmp.eq.s32.totalorder %s15, 0
    %p57 = por %p55, %p56
    %p58 = scmp.ne.s32.totalorder %s46, %s47
    %p59 = scmp.eq.s32.totalorder %s16, 1
    %p60 = por %p58, %p59
    %p62 = scmp.ne.s32.totalorder %s47, %s61
    %p63 = scmp.eq.s32.totalorder %s16, 0
    %p64 = por %p62, %p63
    %s66 = sadd.s32 %s65, 1
    %p69 = scmp.eq.s32.totalorder %s10, 1
    %p70 = scmp.ne.s32.totalorder %s65, %s67
    %p71 = scmp.eq.s32.totalorder %s10, 0
    %p72 = por %p70, %p71
    %p73 = scmp.ne.s32.totalorder %s65, %s67
    %p74 = scmp.eq.s32.totalorder %s15, 1
    %p75 = por %p73, %p74
    %p76 = scmp.ne.s32.totalorder %s67, %s68
    %p77 = scmp.eq.s32.totalorder %s15, 0
    %p78 = por %p76, %p77
    %p79 = scmp.ne.s32.totalorder %s67, %s68
    %p80 = scmp.eq.s32.totalorder %s16, 1
    %p81 = por %p79, %p80
    %p83 = scmp.ne.s32.totalorder %s68, %s82
    %p84 = scmp.eq.s32.totalorder %s16, 0
    %p85 = por %p83, %p84
    %s87 = sadd.s32 %s86, 1
    %p90 = scmp.eq.s32.totalorder %s10, 1
    %p91 = scmp.ne.s32.totalorder %s86, %s88
    %p92 = scmp.eq.s32.totalorder %s10, 0
    %p93 = por %p91, %p92
    %p94 = scmp.ne.s32.totalorder %s86, %s88
    %p95 = scmp.eq.s32.totalorder %s15, 1
    %p96 = por %p94, %p95
    %p97 = scmp.ne.s32.totalorder %s88, %s89
    %p98 = scmp.eq.s32.totalorder %s15, 0
    %p99 = por %p97, %p98
    %p100 = scmp.ne.s32.totalorder %s88, %s89
    %p101 = scmp.eq.s32.totalorder %s16, 1
    %p102 = por %p100, %p101
    %p104 = scmp.ne.s32.totalorder %s89, %s103
    %p105 = scmp.eq.s32.totalorder %s16, 0
    %p106 = por %p104, %p105
    %s107 = ssub.s32 %s10, %s17
    %p108 = scmp.eq.s32.totalorder %s107, 0
    %s110 = sadd.s32 %s109, 1
    %s111 = scalar_select %p108, %s109, %s110
    %p114 = pneg %p108
    %p115 = scmp.eq.s32.totalorder %s10, 1
    %p116 = por %p114, %p115
    %p117 = scmp.ne.s32.totalorder %s109, %s112
    %p118 = scmp.eq.s32.totalorder %s10, 0
    %p119 = por %p117, %p118
    %p120 = scmp.ne.s32.totalorder %s109, %s112
    %p121 = scmp.eq.s32.totalorder %s15, 1
    %p122 = por %p120, %p121
    %p123 = scmp.ne.s32.totalorder %s112, %s113
    %p124 = scmp.eq.s32.totalorder %s15, 0
    %p125 = por %p123, %p124
    %p126 = scmp.ne.s32.totalorder %s112, %s113
    %p127 = scmp.eq.s32.totalorder %s16, 1
    %p128 = por %p126, %p127
    %p130 = scmp.ne.s32.totalorder %s113, %s129
    %p131 = scmp.eq.s32.totalorder %s16, 0
    %p132 = por %p130, %p131
    %p133 = scmp.le.s32.totalorder 1, %s10
    %p134 = scmp.lt.s32.totalorder %s10, 3
    %p135 = pnand %p133, %p134
    %p136 = pneg %p135
    // Predicated region
    $region9: #{forward_pallas.1} parent=5 // pred_check
      _
    $region10: #{forward_pallas.1} parent=5 // pred_check_branch
      %138 = sbr.rel (%p135) target = $region12
    $region11: #{forward_pallas.1} parent=5 // pred_region
      %s139 = ssub.s32 %s10, 1
      // Predicated region
      $region13: #{forward_pallas.1} parent=11 // pred_check
        %p140 = pneg %p57
      $region14: #{forward_pallas.1} parent=11 // pred_check_branch
        %142 = sbr.rel (%p140) target = $region16
      $region15: #{forward_pallas.1} parent=11 // pred_region
        _
      $region16: #{forward_pallas.1} parent=11 // pred_fallthru
        _
      // Predicated region
      $region17: #{forward_pallas.1} parent=11 // pred_check
        %p143 = pneg %p78
      $region18: #{forward_pallas.1} parent=11 // pred_check_branch
        %145 = sbr.rel (%p143) target = $region20
      $region19: #{forward_pallas.1} parent=11 // pred_region
        _
      $region20: #{forward_pallas.1} parent=11 // pred_fallthru
        _
      // Predicated region
      $region21: #{forward_pallas.1} parent=11 // pred_check
        %p146 = pneg %p99
      $region22: #{forward_pallas.1} parent=11 // pred_check_branch
        %148 = sbr.rel (%p146) target = $region24
      $region23: #{forward_pallas.1} parent=11 // pred_region
        _
      $region24: #{forward_pallas.1} parent=11 // pred_fallthru
        _
    $region12: #{forward_pallas.1} parent=5 // pred_fallthru
      _
    %p149 = scmp.lt.s32.totalorder %s10, 2
    // Predicated region
    $region25: #{forward_pallas.1} parent=5 // pred_check
      %p150 = pneg %p149
    $region26: #{forward_pallas.1} parent=5 // pred_check_branch
      %152 = sbr.rel (%p150) target = $region28
    $region27: #{forward_pallas.1} parent=5 // pred_region
      // Predicated region
      $region29: #{forward_pallas.1} parent=27 // pred_check
        %p153 = pneg %p30
      $region30: #{forward_pallas.1} parent=27 // pred_check_branch
        %155 = sbr.rel (%p153) target = $region32
      $region31: #{forward_pallas.1} parent=27 // pred_region
        %p156 = scmp.lt.s32.totalorder %s10, 1
        %s157 = scalar_select %p156, %s10, 1
        %s158 = smul.addr %s157, 2
        %s159 = smul.addr %s158, 8
        %s160 = scalar_lea.vmem %s0, %s159
      $region32: #{forward_pallas.1} parent=27 // pred_fallthru
        _
    $region28: #{forward_pallas.1} parent=5 // pred_fallthru
      _
    %p161 = scmp.le.s32.totalorder 1, %s10
    %p162 = scmp.lt.s32.totalorder %s10, 3
    %p163 = pnand %p161, %p162
    %p164 = pneg %p163
    // Predicated region
    $region33: #{forward_pallas.1} parent=5 // pred_check
      _
    $region34: #{forward_pallas.1} parent=5 // pred_check_branch
      %166 = sbr.rel (%p163) target = $region36
    $region35: #{forward_pallas.1} parent=5 // pred_region
      %s167 = ssub.s32 %s10, 1
      %p168 = scmp.lt.s32.totalorder %s15, 1
      %s169 = scalar_select %p168, %s15, 1
      %s170 = smul.addr %s169, 2
      %s171 = smul.addr %s170, 8
      %s172 = scalar_lea.vmem %s0, %s171
      %p173 = pneg %p36
      %p174 = pneg %p33
      %p175 = pneg %p57
      %p176 = pneg %p54
      %p177 = pneg %p78
      %p178 = pneg %p75
      %p179 = pneg %p99
      %p180 = pneg %p96
      %p181 = pneg %p125
      %p182 = pneg %p122
      %p183 = scmp.lt.s32.totalorder %s15, 1
      %s184 = scalar_select %p183, %s15, 1
      %s185 = smul.addr %s184, 2
      %s186 = smul.addr %s185, 8
      %s187 = scalar_lea.vmem %s4, %s186
      %p188 = scmp.lt.s32.totalorder %s15, 1
      %s189 = scalar_select %p188, %s15, 1
      %s190 = smul.addr %s189, 2
      %s191 = smul.addr %s190, 8
      %s192 = scalar_lea.vmem %s0, %s191
      %p193 = scmp.lt.s32.totalorder %s15, 1
      %s194 = scalar_select %p193, %s15, 1
      %s195 = smul.addr %s194, 2
      %s196 = smul.addr %s195, 8
      %s197 = scalar_lea.vmem %s4, %s196
      %v198 = vlaneseq
      %v199 = vshrl.u32 %v198, 7
      %v200 = vadd.s32 %v199, 8
      %vm201 = vcmp.eq.s32.totalorder %v199, 0
      %vm202 = vcmp.eq.s32.totalorder %v200, 0
      %vm203 = vcmp.eq.s32.totalorder %v199, 15
      %vm204 = vcmp.eq.s32.totalorder %v200, 15
      %v205 = vld [vmem:[%s192] sm:$0xff]
      %v206 = vld [vmem:[%s192 + $0x8] sm:$0xff]
      %v207 = vld [vmem:[%s3] sm:$0x1]
      %v208 = vld [vmem:[%s1] sm:$0xf]
      %v209 = vld [vmem:[%s1 + $0x4] sm:$0xf]
      %v210 = vld [vmem:[%s1 + $0x8] sm:$0xf]
      %v211 = vld [vmem:[%s1 + $0xc] sm:$0xf]
      %v212 = vld [vmem:[%s1 + $0x10] sm:$0xf]
      %v213 = vld [vmem:[%s1 + $0x14] sm:$0xf]
      %v214 = vld [vmem:[%s1 + $0x18] sm:$0xf]
      %v215 = vld [vmem:[%s1 + $0x1c] sm:$0xf]
      %v216 = vld [vmem:[%s1 + $0x20] sm:$0xf]
      %v217 = vld [vmem:[%s1 + $0x24] sm:$0xf]
      %v218 = vld [vmem:[%s1 + $0x28] sm:$0xf]
      %v219 = vld [vmem:[%s1 + $0x2c] sm:$0xf]
      %v220 = vld [vmem:[%s1 + $0x30] sm:$0xf]
      %v221 = vld [vmem:[%s1 + $0x34] sm:$0xf]
      %v222 = vld [vmem:[%s1 + $0x38] sm:$0xf]
      %v223 = vld [vmem:[%s1 + $0x3c] sm:$0xf]
      %v224 = vld [vmem:[%s1 + $0x40] sm:$0xf]
      %v225 = vld [vmem:[%s1 + $0x44] sm:$0xf]
      %v226 = vld [vmem:[%s1 + $0x48] sm:$0xf]
      %v227 = vld [vmem:[%s1 + $0x4c] sm:$0xf]
      %v228 = vld [vmem:[%s1 + $0x50] sm:$0xf]
      %v229 = vld [vmem:[%s1 + $0x54] sm:$0xf]
      %v230 = vld [vmem:[%s1 + $0x58] sm:$0xf]
      %v231 = vld [vmem:[%s1 + $0x5c] sm:$0xf]
      %v232 = vld [vmem:[%s1 + $0x60] sm:$0xf]
      %v233 = vld [vmem:[%s1 + $0x64] sm:$0xf]
      %v234 = vld [vmem:[%s1 + $0x68] sm:$0xf]
      %v235 = vld [vmem:[%s1 + $0x6c] sm:$0xf]
      %v236 = vld [vmem:[%s1 + $0x70] sm:$0xf]
      %v237 = vld [vmem:[%s1 + $0x74] sm:$0xf]
      %v238 = vld [vmem:[%s1 + $0x78] sm:$0xf]
      %v239 = vld [vmem:[%s1 + $0x7c] sm:$0xf]
      %v240 = vld [vmem:[%s1 + $0x80] sm:$0xf]
      %v241 = vld [vmem:[%s1 + $0x84] sm:$0xf]
      %v242 = vld [vmem:[%s1 + $0x88] sm:$0xf]
      %v243 = vld [vmem:[%s1 + $0x8c] sm:$0xf]
      %v244 = vld [vmem:[%s1 + $0x90] sm:$0xf]
      %v245 = vld [vmem:[%s1 + $0x94] sm:$0xf]
      %v246 = vld [vmem:[%s1 + $0x98] sm:$0xf]
      %v247 = vld [vmem:[%s1 + $0x9c] sm:$0xf]
      %v248 = vld [vmem:[%s1 + $0xa0] sm:$0xf]
      %v249 = vld [vmem:[%s1 + $0xa4] sm:$0xf]
      %v250 = vld [vmem:[%s1 + $0xa8] sm:$0xf]
      %v251 = vld [vmem:[%s1 + $0xac] sm:$0xf]
      %v252 = vld [vmem:[%s1 + $0xb0] sm:$0xf]
      %v253 = vld [vmem:[%s1 + $0xb4] sm:$0xf]
      %v254 = vld [vmem:[%s1 + $0xb8] sm:$0xf]
      %v255 = vld [vmem:[%s1 + $0xbc] sm:$0xf]
      %v256 = vrot.slane %v205, 7
      %v257 = vrot.slane %v206, 7
      %vm258 = vcmp.lt.s32.totalorder %v199, 1
      %v259 = vsel %vm258, %v256, %v257
      %v260 = vsel %vm258, %v257, %v256
      %v261 = vsel %vm201, 0.0, %v260
      %v262 = vsel %vm202, 0.0, %v259
      %v263 = vrot.slane %v205, 1
      %v264 = vrot.slane %v206, 1
      %vm265 = vcmp.lt.s32.totalorder %v199, 7
      %v266 = vsel %vm265, %v263, %v264
      %v267 = vsel %vm265, %v264, %v263
      %v268 = vsel %vm203, 0.0, %v266
      %v269 = vsel %vm204, 0.0, %v267
      %v270 = vpack.c.bf16 %v262, %v261
      %v271 = vpack.c.bf16 %v206, %v205
      %v272 = vpack.c.bf16 %v269, %v268
      %v274 = vperm.slane %v207, 0
      %v324 = vunpack.c.l.b16 %v208
      %v325 = vunpack.c.l.b16 %v209
      %v326 = vunpack.c.l.b16 %v210
      %v327 = vunpack.c.l.b16 %v211
      %v328 = vunpack.c.l.b16 %v212
      %v329 = vunpack.c.l.b16 %v213
      %v330 = vunpack.c.l.b16 %v214
      %v331 = vunpack.c.l.b16 %v215
      %v332 = vunpack.c.l.b16 %v216
      %v333 = vunpack.c.l.b16 %v217
      %v334 = vunpack.c.l.b16 %v218
      %v335 = vunpack.c.l.b16 %v219
      %v336 = vunpack.c.l.b16 %v220
      %v337 = vunpack.c.l.b16 %v221
      %v338 = vunpack.c.l.b16 %v222
      %v339 = vunpack.c.l.b16 %v223
      %v340 = vunpack.c.l.b16 %v224
      %v341 = vunpack.c.l.b16 %v225
      %v342 = vunpack.c.l.b16 %v226
      %v343 = vunpack.c.l.b16 %v227
      %v344 = vunpack.c.l.b16 %v228
      %v345 = vunpack.c.l.b16 %v229
      %v346 = vunpack.c.l.b16 %v230
      %v347 = vunpack.c.l.b16 %v231
      %v348 = vunpack.c.l.b16 %v232
      %v349 = vunpack.c.l.b16 %v233
      %v350 = vunpack.c.l.b16 %v234
      %v351 = vunpack.c.l.b16 %v235
      %v352 = vunpack.c.l.b16 %v236
      %v353 = vunpack.c.l.b16 %v237
      %v354 = vunpack.c.l.b16 %v238
      %v355 = vunpack.c.l.b16 %v239
      %v356 = vunpack.c.l.b16 %v240
      %v357 = vunpack.c.l.b16 %v241
      %v358 = vunpack.c.l.b16 %v242
      %v359 = vunpack.c.l.b16 %v243
      %v360 = vunpack.c.l.b16 %v244
      %v361 = vunpack.c.l.b16 %v245
      %v362 = vunpack.c.l.b16 %v246
      %v363 = vunpack.c.l.b16 %v247
      %v364 = vunpack.c.l.b16 %v248
      %v365 = vunpack.c.l.b16 %v249
      %v366 = vunpack.c.l.b16 %v250
      %v367 = vunpack.c.l.b16 %v251
      %v368 = vunpack.c.l.b16 %v252
      %v369 = vunpack.c.l.b16 %v253
      %v370 = vunpack.c.l.b16 %v254
      %v371 = vunpack.c.l.b16 %v255
      %v372 = vpack.c.b16 %v325, %v324
      %v373 = vpack.c.b16 %v327, %v326
      %v374 = vpack.c.b16 %v329, %v328
      %v375 = vpack.c.b16 %v331, %v330
      %v376 = vpack.c.b16 %v333, %v332
      %v377 = vpack.c.b16 %v335, %v334
      %v378 = vpack.c.b16 %v337, %v336
      %v379 = vpack.c.b16 %v339, %v338
      %v380 = vpack.c.b16 %v341, %v340
      %v381 = vpack.c.b16 %v343, %v342
      %v382 = vpack.c.b16 %v345, %v344
      %v383 = vpack.c.b16 %v347, %v346
      %v384 = vpack.c.b16 %v349, %v348
      %v385 = vpack.c.b16 %v351, %v350
      %v386 = vpack.c.b16 %v353, %v352
      %v387 = vpack.c.b16 %v355, %v354
      %v388 = vpack.c.b16 %v357, %v356
      %v389 = vpack.c.b16 %v359, %v358
      %v390 = vpack.c.b16 %v361, %v360
      %v391 = vpack.c.b16 %v363, %v362
      %v392 = vpack.c.b16 %v365, %v364
      %v393 = vpack.c.b16 %v367, %v366
      %v394 = vpack.c.b16 %v369, %v368
      %v395 = vpack.c.b16 %v371, %v370
      %420 = vmatpush.bf16.msra.mxu0 %v379
      %421 = vmatpush.bf16.msra.mxu0 %v378
      %422 = vmatpush.bf16.msra.mxu0 %v377
      %423 = vmatpush.bf16.msra.mxu0 %v376
      %424 = vmatpush.bf16.msra.mxu0 %v375
      %425 = vmatpush.bf16.msra.mxu0 %v374
      %426 = vmatpush.bf16.msra.mxu0 %v373
      %427 = vmatpush.bf16.msra.mxu0 %v372
      %428 = vmatmul.bf16.gmra.mxu0 %v270
      %v429 = vpop.f32.mrf.mxu0
      %v430 = vadd.f32 %v274, %v429
      %v431 = vpop.f32.mrf.mxu0
      %v432 = vadd.f32 %v274, %v431
      %433 = vdwg.mxu0
      %434 = vmatpush.bf16.msra.mxu0 %v387
      %435 = vmatpush.bf16.msra.mxu0 %v386
      %436 = vmatpush.bf16.msra.mxu0 %v385
      %437 = vmatpush.bf16.msra.mxu0 %v384
      %438 = vmatpush.bf16.msra.mxu0 %v383
      %439 = vmatpush.bf16.msra.mxu0 %v382
      %440 = vmatpush.bf16.msra.mxu0 %v381
      %441 = vmatpush.bf16.msra.mxu0 %v380
      %442 = vmatmul.bf16.gmra.mxu0 %v271
      %v443 = vpop.f32.mrf.mxu0
      %v444 = vadd.f32 %v430, %v443
      %v445 = vpop.f32.mrf.mxu0
      %v446 = vadd.f32 %v432, %v445
      %447 = vdwg.mxu0
      %448 = vmatpush.bf16.msra.mxu0 %v395
      %449 = vmatpush.bf16.msra.mxu0 %v394
      %450 = vmatpush.bf16.msra.mxu0 %v393
      %451 = vmatpush.bf16.msra.mxu0 %v392
      %452 = vmatpush.bf16.msra.mxu0 %v391
      %453 = vmatpush.bf16.msra.mxu0 %v390
      %454 = vmatpush.bf16.msra.mxu0 %v389
      %455 = vmatpush.bf16.msra.mxu0 %v388
      %456 = vmatmul.bf16.gmra.mxu0 %v272
      %v457 = vpop.f32.mrf.mxu0
      %v458 = vadd.f32 %v444, %v457
      %v459 = vpop.f32.mrf.mxu0
      %v460 = vadd.f32 %v446, %v459
      %461 = vdwg.mxu0
      %v462 = vmax.f32 %v458, 0.0
      %v463 = vmax.f32 %v460, 0.0
      %s464 = scalar_lea.vmem %s3, 1
      %v465 = vld [vmem:[%s464] sm:$0x1]
      %v466 = vld [vmem:[%s2] sm:$0xf]
      %v467 = vld [vmem:[%s2 + $0x4] sm:$0xf]
      %v468 = vld [vmem:[%s2 + $0x8] sm:$0xf]
      %v469 = vld [vmem:[%s2 + $0xc] sm:$0xf]
      %v470 = vld [vmem:[%s2 + $0x10] sm:$0xf]
      %v471 = vld [vmem:[%s2 + $0x14] sm:$0xf]
      %v472 = vld [vmem:[%s2 + $0x18] sm:$0xf]
      %v473 = vld [vmem:[%s2 + $0x1c] sm:$0xf]
      %v474 = vld [vmem:[%s2 + $0x20] sm:$0xf]
      %v475 = vld [vmem:[%s2 + $0x24] sm:$0xf]
      %v476 = vld [vmem:[%s2 + $0x28] sm:$0xf]
      %v477 = vld [vmem:[%s2 + $0x2c] sm:$0xf]
      %v478 = vld [vmem:[%s2 + $0x30] sm:$0xf]
      %v479 = vld [vmem:[%s2 + $0x34] sm:$0xf]
      %v480 = vld [vmem:[%s2 + $0x38] sm:$0xf]
      %v481 = vld [vmem:[%s2 + $0x3c] sm:$0xf]
      %v482 = vpack.c.bf16 %v463, %v462
      %v484 = vperm.slane %v465, 0
      %v502 = vunpack.c.l.b16 %v466
      %v503 = vunpack.c.l.b16 %v467
      %v504 = vunpack.c.l.b16 %v468
      %v505 = vunpack.c.l.b16 %v469
      %v506 = vunpack.c.l.b16 %v470
      %v507 = vunpack.c.l.b16 %v471
      %v508 = vunpack.c.l.b16 %v472
      %v509 = vunpack.c.l.b16 %v473
      %v510 = vunpack.c.l.b16 %v474
      %v511 = vunpack.c.l.b16 %v475
      %v512 = vunpack.c.l.b16 %v476
      %v513 = vunpack.c.l.b16 %v477
      %v514 = vunpack.c.l.b16 %v478
      %v515 = vunpack.c.l.b16 %v479
      %v516 = vunpack.c.l.b16 %v480
      %v517 = vunpack.c.l.b16 %v481
      %v518 = vpack.c.b16 %v503, %v502
      %v519 = vpack.c.b16 %v505, %v504
      %v520 = vpack.c.b16 %v507, %v506
      %v521 = vpack.c.b16 %v509, %v508
      %v522 = vpack.c.b16 %v511, %v510
      %v523 = vpack.c.b16 %v513, %v512
      %v524 = vpack.c.b16 %v515, %v514
      %v525 = vpack.c.b16 %v517, %v516
      %534 = vmatpush.bf16.msra.mxu0 %v525
      %535 = vmatpush.bf16.msra.mxu0 %v524
      %536 = vmatpush.bf16.msra.mxu0 %v523
      %537 = vmatpush.bf16.msra.mxu0 %v522
      %538 = vmatpush.bf16.msra.mxu0 %v521
      %539 = vmatpush.bf16.msra.mxu0 %v520
      %540 = vmatpush.bf16.msra.mxu0 %v519
      %541 = vmatpush.bf16.msra.mxu0 %v518
      %542 = vmatmul.bf16.gmra.mxu0 %v482
      %v543 = vpop.f32.mrf.mxu0
      %v544 = vadd.f32 %v484, %v543
      %v545 = vpop.f32.mrf.mxu0
      %v546 = vadd.f32 %v484, %v545
      %547 = vdwg.mxu0
      %v548 = vmax.f32 %v544, 0.0
      %v549 = vmax.f32 %v546, 0.0
      %v550 = vadd.f32 %v205, %v548
      %v551 = vadd.f32 %v206, %v549
      %s552 = scalar_lea.vmem %s3, 2
      %v553 = vld [vmem:[%s552] sm:$0x1]
      %s554 = scalar_lea.vmem %s1, 192
      %v555 = vld [vmem:[%s554] sm:$0xf]
      %v556 = vld [vmem:[%s554 + $0x4] sm:$0xf]
      %v557 = vld [vmem:[%s554 + $0x8] sm:$0xf]
      %v558 = vld [vmem:[%s554 + $0xc] sm:$0xf]
      %v559 = vld [vmem:[%s554 + $0x10] sm:$0xf]
      %v560 = vld [vmem:[%s554 + $0x14] sm:$0xf]
      %v561 = vld [vmem:[%s554 + $0x18] sm:$0xf]
      %v562 = vld [vmem:[%s554 + $0x1c] sm:$0xf]
      %v563 = vld [vmem:[%s554 + $0x20] sm:$0xf]
      %v564 = vld [vmem:[%s554 + $0x24] sm:$0xf]
      %v565 = vld [vmem:[%s554 + $0x28] sm:$0xf]
      %v566 = vld [vmem:[%s554 + $0x2c] sm:$0xf]
      %v567 = vld [vmem:[%s554 + $0x30] sm:$0xf]
      %v568 = vld [vmem:[%s554 + $0x34] sm:$0xf]
      %v569 = vld [vmem:[%s554 + $0x38] sm:$0xf]
      %v570 = vld [vmem:[%s554 + $0x3c] sm:$0xf]
      %v571 = vld [vmem:[%s554 + $0x40] sm:$0xf]
      %v572 = vld [vmem:[%s554 + $0x44] sm:$0xf]
      %v573 = vld [vmem:[%s554 + $0x48] sm:$0xf]
      %v574 = vld [vmem:[%s554 + $0x4c] sm:$0xf]
      %v575 = vld [vmem:[%s554 + $0x50] sm:$0xf]
      %v576 = vld [vmem:[%s554 + $0x54] sm:$0xf]
      %v577 = vld [vmem:[%s554 + $0x58] sm:$0xf]
      %v578 = vld [vmem:[%s554 + $0x5c] sm:$0xf]
      %v579 = vld [vmem:[%s554 + $0x60] sm:$0xf]
      %v580 = vld [vmem:[%s554 + $0x64] sm:$0xf]
      %v581 = vld [vmem:[%s554 + $0x68] sm:$0xf]
      %v582 = vld [vmem:[%s554 + $0x6c] sm:$0xf]
      %v583 = vld [vmem:[%s554 + $0x70] sm:$0xf]
      %v584 = vld [vmem:[%s554 + $0x74] sm:$0xf]
      %v585 = vld [vmem:[%s554 + $0x78] sm:$0xf]
      %v586 = vld [vmem:[%s554 + $0x7c] sm:$0xf]
      %v587 = vld [vmem:[%s554 + $0x80] sm:$0xf]
      %v588 = vld [vmem:[%s554 + $0x84] sm:$0xf]
      %v589 = vld [vmem:[%s554 + $0x88] sm:$0xf]
      %v590 = vld [vmem:[%s554 + $0x8c] sm:$0xf]
      %v591 = vld [vmem:[%s554 + $0x90] sm:$0xf]
      %v592 = vld [vmem:[%s554 + $0x94] sm:$0xf]
      %v593 = vld [vmem:[%s554 + $0x98] sm:$0xf]
      %v594 = vld [vmem:[%s554 + $0x9c] sm:$0xf]
      %v595 = vld [vmem:[%s554 + $0xa0] sm:$0xf]
      %v596 = vld [vmem:[%s554 + $0xa4] sm:$0xf]
      %v597 = vld [vmem:[%s554 + $0xa8] sm:$0xf]
      %v598 = vld [vmem:[%s554 + $0xac] sm:$0xf]
      %v599 = vld [vmem:[%s554 + $0xb0] sm:$0xf]
      %v600 = vld [vmem:[%s554 + $0xb4] sm:$0xf]
      %v601 = vld [vmem:[%s554 + $0xb8] sm:$0xf]
      %v602 = vld [vmem:[%s554 + $0xbc] sm:$0xf]
      %v604 = vperm.slane %v553, 0
      %v654 = vunpack.c.l.b16 %v555
      %v655 = vunpack.c.l.b16 %v556
      %v656 = vunpack.c.l.b16 %v557
      %v657 = vunpack.c.l.b16 %v558
      %v658 = vunpack.c.l.b16 %v559
      %v659 = vunpack.c.l.b16 %v560
      %v660 = vunpack.c.l.b16 %v561
      %v661 = vunpack.c.l.b16 %v562
      %v662 = vunpack.c.l.b16 %v563
      %v663 = vunpack.c.l.b16 %v564
      %v664 = vunpack.c.l.b16 %v565
      %v665 = vunpack.c.l.b16 %v566
      %v666 = vunpack.c.l.b16 %v567
      %v667 = vunpack.c.l.b16 %v568
      %v668 = vunpack.c.l.b16 %v569
      %v669 = vunpack.c.l.b16 %v570
      %v670 = vunpack.c.l.b16 %v571
      %v671 = vunpack.c.l.b16 %v572
      %v672 = vunpack.c.l.b16 %v573
      %v673 = vunpack.c.l.b16 %v574
      %v674 = vunpack.c.l.b16 %v575
      %v675 = vunpack.c.l.b16 %v576
      %v676 = vunpack.c.l.b16 %v577
      %v677 = vunpack.c.l.b16 %v578
      %v678 = vunpack.c.l.b16 %v579
      %v679 = vunpack.c.l.b16 %v580
      %v680 = vunpack.c.l.b16 %v581
      %v681 = vunpack.c.l.b16 %v582
      %v682 = vunpack.c.l.b16 %v583
      %v683 = vunpack.c.l.b16 %v584
      %v684 = vunpack.c.l.b16 %v585
      %v685 = vunpack.c.l.b16 %v586
      %v686 = vunpack.c.l.b16 %v587
      %v687 = vunpack.c.l.b16 %v588
      %v688 = vunpack.c.l.b16 %v589
      %v689 = vunpack.c.l.b16 %v590
      %v690 = vunpack.c.l.b16 %v591
      %v691 = vunpack.c.l.b16 %v592
      %v692 = vunpack.c.l.b16 %v593
      %v693 = vunpack.c.l.b16 %v594
      %v694 = vunpack.c.l.b16 %v595
      %v695 = vunpack.c.l.b16 %v596
      %v696 = vunpack.c.l.b16 %v597
      %v697 = vunpack.c.l.b16 %v598
      %v698 = vunpack.c.l.b16 %v599
      %v699 = vunpack.c.l.b16 %v600
      %v700 = vunpack.c.l.b16 %v601
      %v701 = vunpack.c.l.b16 %v602
      %v702 = vpack.c.b16 %v655, %v654
      %v703 = vpack.c.b16 %v657, %v656
      %v704 = vpack.c.b16 %v659, %v658
      %v705 = vpack.c.b16 %v661, %v660
      %v706 = vpack.c.b16 %v663, %v662
      %v707 = vpack.c.b16 %v665, %v664
      %v708 = vpack.c.b16 %v667, %v666
      %v709 = vpack.c.b16 %v669, %v668
      %v710 = vpack.c.b16 %v671, %v670
      %v711 = vpack.c.b16 %v673, %v672
      %v712 = vpack.c.b16 %v675, %v674
      %v713 = vpack.c.b16 %v677, %v676
      %v714 = vpack.c.b16 %v679, %v678
      %v715 = vpack.c.b16 %v681, %v680
      %v716 = vpack.c.b16 %v683, %v682
      %v717 = vpack.c.b16 %v685, %v684
      %v718 = vpack.c.b16 %v687, %v686
      %v719 = vpack.c.b16 %v689, %v688
      %v720 = vpack.c.b16 %v691, %v690
      %v721 = vpack.c.b16 %v693, %v692
      %v722 = vpack.c.b16 %v695, %v694
      %v723 = vpack.c.b16 %v697, %v696
      %v724 = vpack.c.b16 %v699, %v698
      %v725 = vpack.c.b16 %v701, %v700
      %750 = vmatpush.bf16.msra.mxu0 %v709
      %751 = vmatpush.bf16.msra.mxu0 %v708
      %752 = vmatpush.bf16.msra.mxu0 %v707
      %753 = vmatpush.bf16.msra.mxu0 %v706
      %754 = vmatpush.bf16.msra.mxu0 %v705
      %755 = vmatpush.bf16.msra.mxu0 %v704
      %756 = vmatpush.bf16.msra.mxu0 %v703
      %757 = vmatpush.bf16.msra.mxu0 %v702
      %758 = vmatmul.bf16.gmra.mxu0 %v270
      %v759 = vpop.f32.mrf.mxu0
      %v760 = vadd.f32 %v604, %v759
      %v761 = vpop.f32.mrf.mxu0
      %v762 = vadd.f32 %v604, %v761
      %763 = vdwg.mxu0
      %764 = vmatpush.bf16.msra.mxu0 %v717
      %765 = vmatpush.bf16.msra.mxu0 %v716
      %766 = vmatpush.bf16.msra.mxu0 %v715
      %767 = vmatpush.bf16.msra.mxu0 %v714
      %768 = vmatpush.bf16.msra.mxu0 %v713
      %769 = vmatpush.bf16.msra.mxu0 %v712
      %770 = vmatpush.bf16.msra.mxu0 %v711
      %771 = vmatpush.bf16.msra.mxu0 %v710
      %772 = vmatmul.bf16.gmra.mxu0 %v271
      %v773 = vpop.f32.mrf.mxu0
      %v774 = vadd.f32 %v760, %v773
      %v775 = vpop.f32.mrf.mxu0
      %v776 = vadd.f32 %v762, %v775
      %777 = vdwg.mxu0
      %778 = vmatpush.bf16.msra.mxu0 %v725
      %779 = vmatpush.bf16.msra.mxu0 %v724
      %780 = vmatpush.bf16.msra.mxu0 %v723
      %781 = vmatpush.bf16.msra.mxu0 %v722
      %782 = vmatpush.bf16.msra.mxu0 %v721
      %783 = vmatpush.bf16.msra.mxu0 %v720
      %784 = vmatpush.bf16.msra.mxu0 %v719
      %785 = vmatpush.bf16.msra.mxu0 %v718
      %786 = vmatmul.bf16.gmra.mxu0 %v272
      %v787 = vpop.f32.mrf.mxu0
      %v788 = vadd.f32 %v774, %v787
      %v789 = vpop.f32.mrf.mxu0
      %v790 = vadd.f32 %v776, %v789
      %791 = vdwg.mxu0
      %v792 = vmax.f32 %v788, 0.0
      %v793 = vmax.f32 %v790, 0.0
      %v794 = vadd.f32 %v792, %v548
      %v795 = vadd.f32 %v793, %v549
      %v796 = vadd.f32 %v550, %v794
      %v797 = vadd.f32 %v551, %v795
      %798 = vst [vmem:[%s197] sm:$0xff] %v796
      %799 = vst [vmem:[%s197 + $0x8] sm:$0xff] %v797
      %p800 = scmp.lt.s32.totalorder %s15, 1
      %s801 = scalar_select %p800, %s15, 1
      %s802 = smul.addr %s801, 2
      %s803 = smul.addr %s802, 8
      %s804 = scalar_lea.vmem %s4, %s803
      // Predicated region
      $region37: #{forward_pallas.1} parent=35 // pred_check
        %p805 = pneg %p122
      $region38: #{forward_pallas.1} parent=35 // pred_check_branch
        %807 = sbr.rel (%p805) target = $region40
      $region39: #{forward_pallas.1} parent=35 // pred_region
        _
      $region40: #{forward_pallas.1} parent=35 // pred_fallthru
        _
    $region36: #{forward_pallas.1} parent=5 // pred_fallthru
      _
    %p808 = scmp.le.s32.totalorder 2, %s10
    // Predicated region
    $region41: #{forward_pallas.1} parent=5 // pred_check
      %p809 = pneg %p808
    $region42: #{forward_pallas.1} parent=5 // pred_check_branch
      %811 = sbr.rel (%p809) target = $region44
    $region43: #{forward_pallas.1} parent=5 // pred_region
      %s812 = ssub.s32 %s10, 2
      // Predicated region
      $region45: #{forward_pallas.1} parent=43 // pred_check
        %p813 = pneg %p128
      $region46: #{forward_pallas.1} parent=43 // pred_check_branch
        %815 = sbr.rel (%p813) target = $region48
      $region47: #{forward_pallas.1} parent=43 // pred_region
        %p816 = scmp.lt.s32.totalorder %s16, 1
        %s817 = scalar_select %p816, %s16, 1
        %s818 = smul.addr %s817, 2
        %s819 = smul.addr %s818, 8
        %s820 = scalar_lea.vmem %s4, %s819
      $region48: #{forward_pallas.1} parent=43 // pred_fallthru
        _
    $region44: #{forward_pallas.1} parent=5 // pred_fallthru
      _
  $region6: #{forward_pallas.1} parent=0 // loop_footer
    %s14 = sadd.s32 1, %s10
  $region7: #{forward_pallas.1} parent=0 // loop_footer_branch
    %9 = sbr.rel target = $region3
  $region8: #{forward_pallas.1} parent=0 // loop_exit
    _

</llo_original>
